<compile_context>
chip_gen: v7x
topology: tpu7x:2x2x1
jax: 0.10.0
libtpu: 0.0.40
codegen_flags: <defaults>
</compile_context>

<pallas_src>
from itertools import accumulate

import numpy as np

import jax
import jax.numpy as jnp
from jax.experimental import pallas as pl
from jax.experimental.pallas import tpu as pltpu


LANE = 128        # TPU lane width
GATHER_G = 128    # rows gathered per grid step (review: 128-256)


def _round_up(x, m):
    return ((int(x) + m - 1) // m) * m


def _bucket_rows(k, g=GATHER_G):
    """Bucket the gathered-row count: multiples of G, or 8*G above 8*G.

    Keeps compiled gather variants bounded while capping padded-row waste well
    below the old pow-2 bucketing's worst-case 2x.
    """
    k = max(int(k), 1)
    if k <= 8 * g:
        return _round_up(k, g)
    return _round_up(k, 8 * g)


# ----------------------------------------------------------------------------
# Pallas kernel 1: batched row gather
#   out[r] = words[word_idx[r]]      (== diag(subset) @ word, rows kept)
#
# Each grid step gathers G rows: issue G row DMAs from HBM-resident `words`
# (picked indices live in SMEM via scalar prefetch), all signalling ONE
# semaphore, then one aggregate wait whose dst is the whole (G, D) staging
# buffer, then one vectorized (G, D) store. Steps are independent, so the grid
# axis is "parallel" (megacore-safe on v7x; same as "arbitrary" on v5e/v6e).
# ----------------------------------------------------------------------------
def _gather_kernel(widx_ref, words_hbm, out_ref, buf, sem):
    G = buf.shape[0]
    base = pl.program_id(0) * G

    # Issue all G row DMAs; every copy signals the same semaphore.
    # TODO(synk): coalesce host-detected runs of consecutive picked indices
    # into one DMA per run (needs dynamic-length copies); per-row descriptors
    # remain the per-step cost floor here.
    for g in range(G):
        row = widx_ref[base + g]
        pltpu.make_async_copy(words_hbm.at[row], buf.at[g], sem.at[0]).start()

    # Single aggregate wait: dst covers all G rows, so its byte count equals
    # the sum of the G row copies that signalled `sem`.  The wrapper guarantees
    # `words` has >= G rows so the phantom src slice is in bounds.
    pltpu.make_async_copy(words_hbm.at[pl.ds(0, G)], buf, sem.at[0]).wait()

    out_ref[...] = buf[...]


@jax.jit
def gather_rows(words_dev, word_idx_padded):
    """out[r, :] = words_dev[word_idx_padded[r], :] for all r (K_pad rows)."""
    K_pad = word_idx_padded.shape[0]
    _, D = words_dev.shape
    G = GATHER_G
    return pl.pallas_call(
        _gather_kernel,
        out_shape=jax.ShapeDtypeStruct((K_pad, D), words_dev.dtype),
        grid_spec=pltpu.PrefetchScalarGridSpec(
            num_scalar_prefetch=1,
            grid=(K_pad // G,),
            in_specs=[pl.BlockSpec(memory_space=pl.ANY)],    # words stay in HBM
            out_specs=pl.BlockSpec((G, D), lambda i, widx: (i, 0)),
            scratch_shapes=[
                pltpu.VMEM((G, D), words_dev.dtype),          # staging buffer
                pltpu.SemaphoreType.DMA((1,)),                # one aggregate sem
            ],
        ),
        compiler_params=pltpu.CompilerParams(
            dimension_semantics=("parallel",)),               # megacore-safe
    )(word_idx_padded, words_dev)


# ----------------------------------------------------------------------------
# Pallas kernel 2: exp_size = sum_k (lam_k / (1 + lam_k))^2 per segment
# Whole batch in one grid step; column 0 sliced on device in the wrapper.
# ----------------------------------------------------------------------------
def _expsize_kernel(vals_ref, out_ref):
    v = jnp.maximum(vals_ref[...], 0.0)                 # clamp (PSD; matches sampler)
    r = v * pl.reciprocal(1.0 + v, approx=True)         # divide on the EUP
    es = jnp.sum(r * r, axis=1, keepdims=True)          # (Bp, 1)
    out_ref[...] = jnp.broadcast_to(es, out_ref.shape)  # lane-dense (Bp, 128) store


@jax.jit
def expected_sizes(vals_padded):
    Bp, n = vals_padded.shape
    out = pl.pallas_call(
        _expsize_kernel,
        out_shape=jax.ShapeDtypeStruct((Bp, LANE), jnp.float32),
        grid=(1,),
        in_specs=[pl.BlockSpec((Bp, n), lambda i: (0, 0))],
        out_specs=pl.BlockSpec((Bp, LANE), lambda i: (0, 0)),
    )(vals_padded)
    return out[:, 0]   # slice on device: D2H carries only Bp floats


# ----------------------------------------------------------------------------
# Host-side DPP sampling (AllInOne equivalent): standard L-ensemble sampler
# ----------------------------------------------------------------------------
def sample_dpp(vals, vecs, rng):
    # TODO(synk): sequential, data-dependent DPP sampling has no clean Pallas
    # equivalent; it runs host-side (numpy) like the original autograd Function.
    n = vals.shape[0]
    lam = np.clip(vals, 0.0, None)
    probs = lam / (1.0 + lam)
    sel = rng.random(n) < probs
    V = vecs[:, sel]
    k = V.shape[1]
    subset = np.zeros(n, dtype=np.float32)
    for _ in range(k):
        P = np.maximum((V ** 2).sum(axis=1), 0.0)
        P = P / P.sum()
        i = int(rng.choice(n, p=P))
        subset[i] = 1.0
        j = int(np.argmax(np.abs(V[i, :])))
        Vj = V[:, j].copy()
        V = V - np.outer(Vj, V[i, :] / V[i, j])
        V = np.delete(V, j, axis=1)
        if V.shape[1] > 0:
            V, _ = np.linalg.qr(V)
    return subset


# ----------------------------------------------------------------------------
# ReinforceSampler forward (module-state mimic)
# ----------------------------------------------------------------------------
class ReinforceSamplerPallas:
    def __init__(self, alpha_iter, seed=0):
        self.alpha_iter = alpha_iter
        self.saved_subsets = None
        self.saved_picks = None
        self.s_ix = None
        self.e_ix = None
        self.exp_sizes = None
        self._rng = np.random.default_rng(seed)

    def forward(self, kernels, words):
        s_ix, e_ix = self.s_ix, self.e_ix
        assert s_ix is not None and e_ix is not None
        alpha_iter = self.alpha_iter
        batch_size = len(s_ix)

        kernels_np = np.asarray(kernels, dtype=np.float32)
        words_np = np.asarray(words, dtype=np.float32)
        N, D = words_np.shape

        # No per-call lane padding of `words`: rows are gathered at native D.
        # Only row-pad (host-side, tiny, only for N < G) so the gather kernel's
        # aggregate-wait descriptor slice stays in bounds.
        if N < GATHER_G:
            words_np = np.pad(words_np, ((0, GATHER_G - N), (0, 0)))
        words_dev = jnp.asarray(words_np)

        actions = self.saved_subsets = [[] for _ in range(batch_size)]
        vals_rows = []
        word_idx = []
        lengths = []
        max_n = max(e - s for s, e in zip(s_ix, e_ix))

        for i, (s, e) in enumerate(zip(s_ix, e_ix)):
            n_i = e - s
            V = kernels_np[s:e]  # (n_i, n_i) PSD DPP kernel for this segment
            # TODO(synk): eigendecomposition (custom_decomp) has no Pallas
            # equivalent; computed host-side.
            vals, vecs = np.linalg.eigh(V)
            vals_rows.append(np.pad(vals, (0, max_n - n_i)).astype(np.float32))

            for _ in range(alpha_iter):
                while True:
                    subset = sample_dpp(vals, vecs, self._rng)
                    if subset.sum() >= 1:
                        break
                actions[i].append(subset)
                picked = np.nonzero(subset)[0]
                word_idx.extend((s + picked).tolist())
                lengths.append(int(picked.size))

        # --- Pallas: expected-size reduction, one block, col 0 sliced on device
        Bp = _round_up(batch_size, 8)
        vals_all = np.zeros((Bp, max_n), dtype=np.float32)
        vals_all[:batch_size] = np.stack(vals_rows, axis=0)
        exp_np = np.asarray(expected_sizes(jnp.asarray(vals_all)))  # (Bp,) D2H
        self.exp_sizes = [float(exp_np[i])
                          for i in range(batch_size) for _ in range(alpha_iter)]

        # --- Pallas: batched row gather (== diag(subset) @ word, rows kept) ---
        # Binary subsets => picked rows are multiplied by exactly 1.0, so the
        # subset-indicator stream is dropped.  # TODO(synk): non-binary subset
        # weights would need the multiply reinstated.
        K_real = len(word_idx)
        K_pad = _bucket_rows(K_real)
        widx = np.zeros(K_pad, dtype=np.int32)     # pad indices -> row 0 (valid)
        widx[:K_real] = np.asarray(word_idx, dtype=np.int32)
        out_padded = gather_rows(words_dev, jnp.asarray(widx))
        output = out_padded[:K_real, :]

        # bookkeeping identical to the torch module
        cum_lengths = list(accumulate(lengths))
        self.s_ix = [c - l for c, l in zip(cum_lengths, lengths)]
        self.e_ix = cum_lengths
        return output


# ----------------------------------------------------------------------------
# Pure-numpy reference of the pick path (for correctness check)
# ----------------------------------------------------------------------------
def reference_picks(kernels_np, words_np, s_ix, e_ix, saved_subsets, alpha_iter):
    outs = []
    for i, (s, e) in enumerate(zip(s_ix, e_ix)):
        word = words_np[s:e]
        for j in range(alpha_iter):
            subset = saved_subsets[i][j]
            pick = np.diag(subset) @ word
            pick = pick[subset.astype(bool)]
            outs.append(pick)
    return np.concatenate(outs, axis=0)


if __name__ == "__main__":
    # Small, deterministic example: batch=2 segments of n=8 words, embd_dim=32.
    batch, n, D = 2, 8, 32
    alpha_iter = 2
    key = jax.random.PRNGKey(0)
    k_a, k_w = jax.random.split(key)

    # Build a PSD DPP kernel per segment and stack rows -> kernels [batch*n, n]
    A = jax.random.normal(k_a, (batch, n, n), dtype=jnp.float32)
    V_blocks = jnp.einsum("bij,bkj->bik", A, A) / n          # (batch, n, n) PSD
    kernels = V_blocks.reshape(batch * n, n)                 # [16, 8]
    words = jax.random.normal(k_w, (batch * n, D), dtype=jnp.float32)  # [16, 32]

    sampler = ReinforceSamplerPallas(alpha_iter, seed=0)
    sampler.s_ix = [0, n]
    sampler.e_ix = [n, 2 * n]
    s_ix_in, e_ix_in = list(sampler.s_ix), list(sampler.e_ix)

    out = sampler.forward(kernels, words)
    out = jax.block_until_ready(out)

    # Check against the pure reference of the selection/matmul path
    ref = reference_picks(np.asarray(kernels), np.asarray(words),
                          s_ix_in, e_ix_in, sampler.saved_subsets, alpha_iter)
    assert out.shape == ref.shape, (out.shape, ref.shape)
    assert np.allclose(np.asarray(out), ref, atol=1e-6)

    # Check exp_size reduction against numpy (kernel clamps eigenvalues >= 0;
    # approx reciprocal on the EUP -> relative tolerance).
    for i, (s, e) in enumerate(zip(s_ix_in, e_ix_in)):
        vals = np.linalg.eigvalsh(np.asarray(kernels)[s:e])
        vals = np.clip(vals, 0.0, None)
        ref_es = float(np.sum((vals / (1.0 + vals)) ** 2))
        got_es = float(sampler.exp_sizes[i * alpha_iter])
        assert abs(got_es - ref_es) <= 1e-2 * max(1.0, abs(ref_es)), (got_es, ref_es)

    print("KERNEL_OK")
</pallas_src>

<mosaic_0001>
module attributes {stable_mosaic.version = 11 : i64} {
  func.func @_expsize_kernel(%arg0: i32, %arg1: memref<8x8xf32, #tpu.memory_space<vmem>>, %arg2: memref<8x128xf32, #tpu.memory_space<vmem>>) attributes {dimension_semantics = [#tpu.dimension_semantics<arbitrary>], iteration_bounds = array<i64: 1>, scalar_prefetch = 0 : i64, scratch_operands = 0 : i64, tpu.core_type = #tpu.core_type<tc>, window_params = [{pipeline_mode = #tpu.pipeline_mode<synchronous>, transform_indices = @transform_0, window_bounds = array<i64: 8, 8>}, {pipeline_mode = #tpu.pipeline_mode<synchronous>, transform_indices = @transform_1, window_bounds = array<i64: 8, 128>}]} {
    %c0 = arith.constant 0 : index
    %c0_0 = arith.constant 0 : index
    %0 = vector.load %arg1[%c0, %c0_0] : memref<8x8xf32, #tpu.memory_space<vmem>>, vector<8x8xf32>
    %cst = arith.constant 0.000000e+00 : f32
    %1 = vector.broadcast %cst : f32 to vector<8x8xf32>
    %2 = arith.maximumf %0, %1 : vector<8x8xf32>
    %cst_1 = arith.constant 1.000000e+00 : f32
    %3 = vector.broadcast %cst_1 : f32 to vector<8x8xf32>
    %4 = arith.addf %3, %2 : vector<8x8xf32>
    %5 = tpu.reciprocal %4 {approx = true} : vector<8x8xf32> -> vector<8x8xf32>
    %6 = arith.mulf %2, %5 : vector<8x8xf32>
    %7 = arith.mulf %6, %6 : vector<8x8xf32>
    %cst_2 = arith.constant dense<0.000000e+00> : vector<8xf32>
    %8 = vector.multi_reduction <add>, %7, %cst_2 [1] : vector<8x8xf32> to vector<8xf32>
    %9 = vector.shape_cast %8 : vector<8xf32> to vector<8x1xf32>
    %10 = vector.shape_cast %9 : vector<8x1xf32> to vector<8x1xf32>
    %11 = vector.broadcast %10 : vector<8x1xf32> to vector<8x128xf32>
    %c0_3 = arith.constant 0 : index
    %c0_4 = arith.constant 0 : index
    %12 = vector.load %arg2[%c0_3, %c0_4] : memref<8x128xf32, #tpu.memory_space<vmem>>, vector<8x128xf32>
    tpu.vector_store %arg2[%c0_3, %c0_4], %11 {strides = array<i32>} : memref<8x128xf32, #tpu.memory_space<vmem>>, vector<8x128xf32>,
    return
  }
  func.func @transform_0(%arg0: i32) -> (i32, i32) {
    %c0_i32 = arith.constant 0 : i32
    %c0_i32_0 = arith.constant 0 : i32
    %c0_i32_1 = arith.constant 0 : i32
    return %c0_i32, %c0_i32_0 : i32, i32
  }
  func.func @transform_1(%arg0: i32) -> (i32, i32) {
    %c0_i32 = arith.constant 0 : i32
    %c0_i32_0 = arith.constant 0 : i32
    %c0_i32_1 = arith.constant 0 : i32
    return %c0_i32, %c0_i32_0 : i32, i32
  }
}

</mosaic_0001>

<llo_original>
// kernel: expected_sizes.1
$region0: #{expected_sizes.1}
  #allocation0 [shape = 'u32[]', space=smem, size = 0x4, offset = 0x4, fixed_abs, tag = 'smem constant byte address 0x4 - core index']
  #allocation1 [shape = 'u32[144,128]{1,0:T(1,128)}', space=vmem, size = 0x12000, scoped, tag = 'internal scratch']
  %s0 = inlined_call_operand.hbm [shape: f32[8,8], index: 0, kind: input, shape index: {}]
  %s1 = inlined_call_operand.vmem [shape: f32[8,128], index: 1, kind: output, shape index: {}]
  %s2 = sld [smem:[#allocation0]]
  $region18: #{expected_sizes.1} parent=0
    _
  %s4 = ssub.s32 1, %s2
  %s5 = scalar_select 0, %s4, %s2
  $region1: #{expected_sizes.1} parent=0
    #allocation2 [shape = 'u8[4096]{0}', space=vmem, size = 0x1000, scoped, tag = 'input window, operand 0, single buffered']
    #allocation3 [shape = 's32[1]{0}', space=sflag, size = 0x4, scoped, tag = 'scoped memory for expected_sizes.1']
    %6 = vsyncpa [#allocation3], 0
    // Predicated region
    $region2: #{expected_sizes.1} parent=1 // pred_check
      _
    $region3: #{expected_sizes.1} parent=1 // pred_check_branch
      %8 = sbr.rel (0) target = $region5
    $region4: #{expected_sizes.1} parent=1 // pred_region
      %s10 = ssub.s32 128, 128
      %11 = vsyncadd [#allocation3], %s10
      %s13 = sshll.u32 [#allocation2], 4
      %s14 = int_to_ptr.vmem [resolvable:$true] %s13
      %16 = dma.hbm_to_vmem [thread:$0]  %s0, 128, %s14, [#allocation3]
    $region5: #{expected_sizes.1} parent=1 // pred_fallthru
      _
    // Predicated region
    $region6: #{expected_sizes.1} parent=1 // pred_check
      _
    $region7: #{expected_sizes.1} parent=1 // pred_check_branch
      %18 = sbr.rel (0) target = $region9
    $region8: #{expected_sizes.1} parent=1 // pred_region
      %19 = dma.done [#allocation3], 128
    $region9: #{expected_sizes.1} parent=1 // pred_fallthru
      _
    %v20 = vld [vmem:[#allocation2] sm:$0xff]
    %v21 = vmax.f32 %v20, 0.0
    %v22 = vadd.f32 %v21, 1.0
    %v23 = vrcp.pop %v22
    %v24 = vmul.f32 %v21, %v23
    %v25 = vmul.f32 %v24, %v24
    %vm26 = vcmask 64512
    %v27 = vsel %vm26, %v25, 0.0
    %28 = vadd.xlane.f32.xlu0 %v27
    %v29 = vpop.xlane.xlu0 %28
    %30 = vst [vmem:[%s1] sm:$0xff] %v29
    // Predicated region
    $region10: #{expected_sizes.1} parent=1 // pred_check
      _
    $region11: #{expected_sizes.1} parent=1 // pred_check_branch
      %32 = sbr.rel (0) target = $region13
    $region12: #{expected_sizes.1} parent=1 // pred_region
      _
    $region13: #{expected_sizes.1} parent=1 // pred_fallthru
      _
    // Predicated region
    $region14: #{expected_sizes.1} parent=1 // pred_check
      _
    $region15: #{expected_sizes.1} parent=1 // pred_check_branch
      %34 = sbr.rel (0) target = $region17
    $region16: #{expected_sizes.1} parent=1 // pred_region
      _
    $region17: #{expected_sizes.1} parent=1 // pred_fallthru
      _
    %35 = vsyncpa [#allocation3], 1

</llo_original>
